<compile_context>
chip_gen: v5e
topology: v5e:2x2
jax: 0.10.0
libtpu: 0.0.40
codegen_flags: <defaults>
</compile_context>

<pallas_src>
import functools
import math

import jax
import jax.numpy as jnp
from jax import lax
from jax.experimental import pallas as pl
from jax.experimental.pallas import tpu as pltpu

_MASK_VALUE = -1e30  # large finite negative; avoids inf - inf NaN corner cases


# ---------------------------------------------------------------------------
# Kernel 1: QKV projection (runs once over the sequence).
# ---------------------------------------------------------------------------
def _qkv_proj_kernel(x_ref, wq_ref, wk_ref, wv_ref, q_ref, k_ref, v_ref, *, scale):
    x = x_ref[...]
    # Three separate dots (not one fused [Wq|Wk|Wv] pass) so no lane-axis slicing
    # is ever needed when d_out is not a multiple of 128.
    q = jnp.dot(x, wq_ref[...], preferred_element_type=jnp.float32)
    q_ref[...] = (q * scale).astype(q_ref.dtype)          # pre-scaled by 1/sqrt(d_out)
    k = jnp.dot(x, wk_ref[...], preferred_element_type=jnp.float32)
    k_ref[...] = k.astype(k_ref.dtype)
    v = jnp.dot(x, wv_ref[...], preferred_element_type=jnp.float32)
    v_ref[...] = v.astype(v_ref.dtype)


# ---------------------------------------------------------------------------
# Kernel 2: causal flash attention over precomputed (scaled) Q, K, V.
# ---------------------------------------------------------------------------
def _fold(i, n):
    """Balanced permutation of the q-tile axis: 0, n-1, 1, n-2, ...

    Adjacent pairs carry constant total causal work, so a contiguous split of
    the "parallel" q axis across v7x's two TensorCores stays load-balanced.
    Pure integer arithmetic -> usable in both index_maps and the kernel body.
    """
    half = i // 2
    odd = i % 2
    return odd * (n - 1 - half) + (1 - odd) * half


def _flash_attn_kernel(q_ref, k_ref, v_ref, o_ref, m_scr, l_scr, acc_scr,
                       *, tile_q, tile_kv, num_q):
    i = pl.program_id(0)          # logical q grid index ("parallel")
    j = pl.program_id(1)          # kv grid index        ("arbitrary", reduction)
    pi = _fold(i, num_q)          # physical q-tile handled by this grid row

    @pl.when(j == 0)
    def _init():
        m_scr[...] = jnp.full_like(m_scr, -jnp.inf)
        l_scr[...] = jnp.zeros_like(l_scr)
        acc_scr[...] = jnp.zeros_like(acc_scr)

    in_bounds = j * tile_kv < (pi + 1) * tile_q       # tile not fully above diagonal
    straddles = (j + 1) * tile_kv > pi * tile_q       # tile touches the diagonal

    def _update(apply_mask):
        # QK^T in the input dtype (bf16-friendly); f32 accumulation on the MXU.
        s = lax.dot_general(q_ref[...], k_ref[...], (((1,), (1,)), ((), ())),
                            preferred_element_type=jnp.float32)  # (tile_q, tile_kv)
        if apply_mask:
            # col <= row  <=>  (local_col - local_row) <= pi*tile_q - j*tile_kv
            offset = pi * tile_q - j * tile_kv
            diff = (lax.broadcasted_iota(jnp.int32, (tile_q, tile_kv), 1)
                    - lax.broadcasted_iota(jnp.int32, (tile_q, tile_kv), 0))
            s = jnp.where(diff <= offset, s, _MASK_VALUE)

        m_prev = m_scr[...]
        m_new = jnp.maximum(m_prev, jnp.max(s, axis=-1, keepdims=True))
        alpha = jnp.exp(m_prev - m_new)
        p = jnp.exp(s - m_new)
        l_scr[...] = alpha * l_scr[...] + jnp.sum(p, axis=-1, keepdims=True)
        # P@V in the input dtype (real cast: V streams in x.dtype), f32 accum.
        acc_scr[...] = alpha * acc_scr[...] + jnp.dot(
            p.astype(v_ref.dtype), v_ref[...], preferred_element_type=jnp.float32)
        m_scr[...] = m_new

    # Interior tiles (fully below the diagonal): no mask math at all.
    @pl.when(jnp.logical_and(in_bounds, jnp.logical_not(straddles)))
    def _interior():
        _update(apply_mask=False)

    # Diagonal-straddling tiles: masked update.
    @pl.when(jnp.logical_and(in_bounds, straddles))
    def _diagonal():
        _update(apply_mask=True)

    @pl.when(j == pl.num_programs(1) - 1)
    def _finalize():
        # Exact divide: runs once per q-tile, so its cost is negligible.
        o_ref[...] = (acc_scr[...] / l_scr[...]).astype(o_ref.dtype)


# ---------------------------------------------------------------------------
# Tiling / VMEM budgeting helpers.
# ---------------------------------------------------------------------------
def _vmem_budget_bytes():
    """~75% of this generation's VMEM (64 MiB on v7x, 128 MiB on v5e/v6e)."""
    cap = 64 << 20
    try:
        cap = int(getattr(pltpu.get_tpu_info(), "vmem_capacity_bytes", cap))
    except Exception:  # API unavailable -> conservative (v7x-safe) default
        pass
    return min((cap * 3) // 4, 96 << 20)


def _choose_tile(seq, max_tile):
    """Largest divisor of seq <= max_tile, preferring 128- then 16-multiples."""
    if seq <= max_tile:
        return seq
    for step in (128, 16, 8):
        t = (max_tile // step) * step
        while t >= step:
            if seq % t == 0:
                return t
            t -= step
    return seq  # no divisor found: use the full (unblocked) axis


def _choose_attn_tiles(seq, d_out, itemsize, budget):
    tile_q = _choose_tile(seq, 512)
    tile_kv = _choose_tile(seq, 256)   # match the 256-wide MXU on v6e/v7x

    def est(tq, tk):
        streams = 2 * itemsize * (tq * d_out + 2 * tk * d_out)  # Q + K + V (dbl-buf)
        out = 2 * itemsize * tq * d_out
        scratch = 4 * tq * (d_out + 2)                           # acc, m, l (f32)
        softmax = 2 * 4 * tq * tk                                # s / p spill slack
        return streams + out + scratch + softmax

    for _ in range(8):
        if est(tile_q, tile_kv) <= budget:
            break
        ntq = _choose_tile(seq, max(tile_q // 2, 128)) if tile_q > 128 else tile_q
        ntk = _choose_tile(seq, max(tile_kv // 2, 128)) if tile_kv > 128 else tile_kv
        if (ntq, ntk) == (tile_q, tile_kv):
            break
        tile_q, tile_kv = ntq, ntk
    return tile_q, tile_kv


# ---------------------------------------------------------------------------
# pallas_call wrappers.
# ---------------------------------------------------------------------------
def _qkv_projection(x, wq_t, wk_t, wv_t, scale, vmem_limit):
    seq, d_in = x.shape
    d_out = wq_t.shape[1]
    tile_p = _choose_tile(seq, 512)
    num_p = seq // tile_p

    kernel = functools.partial(_qkv_proj_kernel, scale=scale)
    itemsize = x.dtype.itemsize
    cost = pl.CostEstimate(
        flops=2 * seq * d_in * 3 * d_out,
        transcendentals=0,
        bytes_accessed=itemsize * (seq * d_in + 3 * d_in * d_out + 3 * seq * d_out),
    )
    out_sds = jax.ShapeDtypeStruct((seq, d_out), x.dtype)

    return pl.pallas_call(
        kernel,
        out_shape=(out_sds, out_sds, out_sds),
        grid_spec=pltpu.PrefetchScalarGridSpec(
            num_scalar_prefetch=0,
            grid=(num_p,),
            in_specs=[
                pl.BlockSpec((tile_p, d_in), lambda i: (i, 0)),     # x rows
                pl.BlockSpec((d_in, d_out), lambda i: (0, 0)),      # Wq^T (resident)
                pl.BlockSpec((d_in, d_out), lambda i: (0, 0)),      # Wk^T (resident)
                pl.BlockSpec((d_in, d_out), lambda i: (0, 0)),      # Wv^T (resident)
            ],
            out_specs=(
                pl.BlockSpec((tile_p, d_out), lambda i: (i, 0)),
                pl.BlockSpec((tile_p, d_out), lambda i: (i, 0)),
                pl.BlockSpec((tile_p, d_out), lambda i: (i, 0)),
            ),
        ),
        compiler_params=pltpu.CompilerParams(
            dimension_semantics=("parallel",),
            vmem_limit_bytes=vmem_limit,
        ),
        cost_estimate=cost,
    )(x, wq_t, wk_t, wv_t)


def _flash_attention(q, k, v, tile_q, tile_kv, vmem_limit):
    seq, d_out = q.shape
    num_q = seq // tile_q
    num_kv = seq // tile_kv

    kernel = functools.partial(
        _flash_attn_kernel, tile_q=tile_q, tile_kv=tile_kv, num_q=num_q)

    def q_index(i, j):
        return (_fold(i, num_q), 0)

    def kv_index(i, j):
        pi = _fold(i, num_q)
        j_last = ((pi + 1) * tile_q - 1) // tile_kv
        # Causally-skipped steps re-request the previous block -> DMA elided.
        return (jnp.minimum(j, j_last), 0)

    itemsize = q.dtype.itemsize
    cost = pl.CostEstimate(
        flops=2 * seq * seq * d_out,                    # QK^T + PV, halved by causality
        transcendentals=(seq * seq) // 2,
        bytes_accessed=itemsize * (2 * seq * d_out
                                   + (seq * seq * d_out) // max(tile_q, 1)),
    )

    return pl.pallas_call(
        kernel,
        out_shape=jax.ShapeDtypeStruct((seq, d_out), q.dtype),
        grid_spec=pltpu.PrefetchScalarGridSpec(
            num_scalar_prefetch=0,
            grid=(num_q, num_kv),
            in_specs=[
                pl.BlockSpec((tile_q, d_out), q_index),     # scaled Q tile
                pl.BlockSpec((tile_kv, d_out), kv_index),   # K tile (clamped)
                pl.BlockSpec((tile_kv, d_out), kv_index),   # V tile (clamped)
            ],
            out_specs=pl.BlockSpec((tile_q, d_out), q_index),
            scratch_shapes=[
                pltpu.VMEM((tile_q, 1), jnp.float32),       # running max m
                pltpu.VMEM((tile_q, 1), jnp.float32),       # running denom l
                pltpu.VMEM((tile_q, d_out), jnp.float32),   # output accumulator
            ],
        ),
        compiler_params=pltpu.CompilerParams(
            dimension_semantics=("parallel", "arbitrary"),
            vmem_limit_bytes=vmem_limit,
        ),
        cost_estimate=cost,
    )(q, k, v)


def self_attention_v2(x, w_query, w_key, w_value):
    """x: (seq, d_in); w_*: PyTorch-style nn.Linear weights of shape (d_out, d_in)."""
    seq, d_in = x.shape
    d_out = w_query.shape[0]
    scale = 1.0 / math.sqrt(float(d_out))

    budget = _vmem_budget_bytes()
    tile_q, tile_kv = _choose_attn_tiles(seq, d_out, x.dtype.itemsize, budget)

    q, k, v = _qkv_projection(x, w_query.T, w_key.T, w_value.T, scale, budget)
    return _flash_attention(q, k, v, tile_q, tile_kv, budget)


def _reference(x, w_query, w_key, w_value):
    """Pure-JAX reference mirroring the PyTorch forward."""
    q = x @ w_query.T
    k = x @ w_key.T
    v = x @ w_value.T
    scores = q @ k.T
    s = scores.shape[0]
    mask = jnp.tril(jnp.ones((s, s)))
    masked = jnp.where(mask == 0, -jnp.inf, scores)
    weights = jax.nn.softmax(masked / math.sqrt(k.shape[-1]), axis=-1)
    return weights @ v


if __name__ == "__main__":
    # Small shapes consistent with the module: x is (context_length, d_in).
    seq, d_in, d_out = 8, 32, 16

    key = jax.random.PRNGKey(0)
    kx, kq, kk, kv_key = jax.random.split(key, 4)

    x = jax.random.normal(kx, (seq, d_in), dtype=jnp.float32)
    # nn.Linear(d_in, d_out) weight shape is (d_out, d_in); qkv_bias=False.
    bound = 1.0 / math.sqrt(d_in)
    w_query = jax.random.uniform(kq, (d_out, d_in), jnp.float32, -bound, bound)
    w_key = jax.random.uniform(kk, (d_out, d_in), jnp.float32, -bound, bound)
    w_value = jax.random.uniform(kv_key, (d_out, d_in), jnp.float32, -bound, bound)

    out = self_attention_v2(x, w_query, w_key, w_value)
    out = jax.block_until_ready(out)

    ref = _reference(x, w_query, w_key, w_value)
    assert out.shape == (seq, d_out)
    # Exact divide in finalize -> tighter tolerance than the previous version.
    assert jnp.allclose(out, ref, atol=1e-3, rtol=1e-3), "mismatch vs reference"

    print("KERNEL_OK")
</pallas_src>

<mosaic_0001>
module attributes {stable_mosaic.version = 11 : i64} {
  func.func @_qkv_proj_kernel(%arg0: i32, %arg1: memref<8x32xf32, #tpu.memory_space<vmem>>, %arg2: memref<32x16xf32, #tpu.memory_space<vmem>>, %arg3: memref<32x16xf32, #tpu.memory_space<vmem>>, %arg4: memref<32x16xf32, #tpu.memory_space<vmem>>, %arg5: memref<8x16xf32, #tpu.memory_space<vmem>>, %arg6: memref<8x16xf32, #tpu.memory_space<vmem>>, %arg7: memref<8x16xf32, #tpu.memory_space<vmem>>) attributes {dimension_semantics = [#tpu.dimension_semantics<parallel>], iteration_bounds = array<i64: 1>, scalar_prefetch = 0 : i64, scratch_operands = 0 : i64, tpu.core_type = #tpu.core_type<tc>, window_params = [{transform_indices = @transform_0, window_bounds = array<i64: 8, 32>}, {pipeline_mode = #tpu.pipeline_mode<synchronous>, transform_indices = @transform_1, window_bounds = array<i64: 32, 16>}, {pipeline_mode = #tpu.pipeline_mode<synchronous>, transform_indices = @transform_2, window_bounds = array<i64: 32, 16>}, {pipeline_mode = #tpu.pipeline_mode<synchronous>, transform_indices = @transform_3, window_bounds = array<i64: 32, 16>}, {transform_indices = @transform_4, window_bounds = array<i64: 8, 16>}, {transform_indices = @transform_5, window_bounds = array<i64: 8, 16>}, {transform_indices = @transform_6, window_bounds = array<i64: 8, 16>}]} {
    %c0 = arith.constant 0 : index
    %c0_0 = arith.constant 0 : index
    %0 = vector.load %arg1[%c0, %c0_0] : memref<8x32xf32, #tpu.memory_space<vmem>>, vector<8x32xf32>
    %c0_1 = arith.constant 0 : index
    %c0_2 = arith.constant 0 : index
    %1 = vector.load %arg2[%c0_1, %c0_2] : memref<32x16xf32, #tpu.memory_space<vmem>>, vector<32x16xf32>
    %cst = arith.constant dense<0.000000e+00> : vector<8x16xf32>
    %2 = tpu.matmul %0, %1, %cst {dimension_numbers = #tpu.dot_dimension_numbers<[1], [0], [0], [1], [0, 0, 1, 1], [], []>} : vector<8x32xf32>, vector<32x16xf32>, vector<8x16xf32> -> vector<8x16xf32>
    %cst_3 = arith.constant 2.500000e-01 : f32
    %3 = vector.broadcast %cst_3 : f32 to vector<8x16xf32>
    %4 = arith.mulf %2, %3 : vector<8x16xf32>
    %c0_4 = arith.constant 0 : index
    %c0_5 = arith.constant 0 : index
    %5 = vector.load %arg5[%c0_4, %c0_5] : memref<8x16xf32, #tpu.memory_space<vmem>>, vector<8x16xf32>
    tpu.vector_store %arg5[%c0_4, %c0_5], %4 {strides = array<i32>} : memref<8x16xf32, #tpu.memory_space<vmem>>, vector<8x16xf32>,
    %c0_6 = arith.constant 0 : index
    %c0_7 = arith.constant 0 : index
    %6 = vector.load %arg3[%c0_6, %c0_7] : memref<32x16xf32, #tpu.memory_space<vmem>>, vector<32x16xf32>
    %cst_8 = arith.constant dense<0.000000e+00> : vector<8x16xf32>
    %7 = tpu.matmul %0, %6, %cst_8 {dimension_numbers = #tpu.dot_dimension_numbers<[1], [0], [0], [1], [0, 0, 1, 1], [], []>} : vector<8x32xf32>, vector<32x16xf32>, vector<8x16xf32> -> vector<8x16xf32>
    %c0_9 = arith.constant 0 : index
    %c0_10 = arith.constant 0 : index
    %8 = vector.load %arg6[%c0_9, %c0_10] : memref<8x16xf32, #tpu.memory_space<vmem>>, vector<8x16xf32>
    tpu.vector_store %arg6[%c0_9, %c0_10], %7 {strides = array<i32>} : memref<8x16xf32, #tpu.memory_space<vmem>>, vector<8x16xf32>,
    %c0_11 = arith.constant 0 : index
    %c0_12 = arith.constant 0 : index
    %9 = vector.load %arg4[%c0_11, %c0_12] : memref<32x16xf32, #tpu.memory_space<vmem>>, vector<32x16xf32>
    %cst_13 = arith.constant dense<0.000000e+00> : vector<8x16xf32>
    %10 = tpu.matmul %0, %9, %cst_13 {dimension_numbers = #tpu.dot_dimension_numbers<[1], [0], [0], [1], [0, 0, 1, 1], [], []>} : vector<8x32xf32>, vector<32x16xf32>, vector<8x16xf32> -> vector<8x16xf32>
    %c0_14 = arith.constant 0 : index
    %c0_15 = arith.constant 0 : index
    %11 = vector.load %arg7[%c0_14, %c0_15] : memref<8x16xf32, #tpu.memory_space<vmem>>, vector<8x16xf32>
    tpu.vector_store %arg7[%c0_14, %c0_15], %10 {strides = array<i32>} : memref<8x16xf32, #tpu.memory_space<vmem>>, vector<8x16xf32>,
    return
  }
  func.func @transform_0(%arg0: i32) -> (i32, i32) {
    %c0_i32 = arith.constant 0 : i32
    %c0_i32_0 = arith.constant 0 : i32
    return %arg0, %c0_i32 : i32, i32
  }
  func.func @transform_1(%arg0: i32) -> (i32, i32) {
    %c0_i32 = arith.constant 0 : i32
    %c0_i32_0 = arith.constant 0 : i32
    %c0_i32_1 = arith.constant 0 : i32
    return %c0_i32, %c0_i32_0 : i32, i32
  }
  func.func @transform_2(%arg0: i32) -> (i32, i32) {
    %c0_i32 = arith.constant 0 : i32
    %c0_i32_0 = arith.constant 0 : i32
    %c0_i32_1 = arith.constant 0 : i32
    return %c0_i32, %c0_i32_0 : i32, i32
  }
  func.func @transform_3(%arg0: i32) -> (i32, i32) {
    %c0_i32 = arith.constant 0 : i32
    %c0_i32_0 = arith.constant 0 : i32
    %c0_i32_1 = arith.constant 0 : i32
    return %c0_i32, %c0_i32_0 : i32, i32
  }
  func.func @transform_4(%arg0: i32) -> (i32, i32) {
    %c0_i32 = arith.constant 0 : i32
    %c0_i32_0 = arith.constant 0 : i32
    return %arg0, %c0_i32 : i32, i32
  }
  func.func @transform_5(%arg0: i32) -> (i32, i32) {
    %c0_i32 = arith.constant 0 : i32
    %c0_i32_0 = arith.constant 0 : i32
    return %arg0, %c0_i32 : i32, i32
  }
  func.func @transform_6(%arg0: i32) -> (i32, i32) {
    %c0_i32 = arith.constant 0 : i32
    %c0_i32_0 = arith.constant 0 : i32
    return %arg0, %c0_i32 : i32, i32
  }
}

</mosaic_0001>

<llo_original>
// kernel: tpu_custom_call.1
$region0: #{tpu_custom_call.1}
  #allocation0 [shape = 'u32[]', space=smem, size = 0x4, offset = 0x4, fixed_abs, tag = 'smem constant byte address 0x4 - core index']
  #allocation1 [shape = 'u32[72,128]{1,0:T(1,128)}', space=vmem, size = 0x9000, scoped, tag = 'internal scratch']
  %s0 = inlined_call_operand.vmem [shape: f32[8,32], index: 0, kind: input, shape index: {}]
  %s1 = inlined_call_operand.vmem [shape: f32[32,16], index: 1, kind: input, shape index: {}]
  %s2 = inlined_call_operand.vmem [shape: f32[32,16], index: 2, kind: input, shape index: {}]
  %s3 = inlined_call_operand.vmem [shape: f32[32,16], index: 3, kind: input, shape index: {}]
  %s4 = inlined_call_operand.hbm [shape: f32[8,16], index: 4, kind: output, shape index: {0}]
  %s5 = inlined_call_operand.hbm [shape: f32[8,16], index: 5, kind: output, shape index: {1}]
  %s6 = inlined_call_operand.hbm [shape: f32[8,16], index: 6, kind: output, shape index: {2}]
  %7 = xla_tuple %s4, %s5, %s6
  %s8 = sld [smem:[#allocation0]]
  $region42: #{tpu_custom_call.1} parent=0
    _
  %s10 = ssub.s32 1, %s8
  %s11 = scalar_select 0, %s10, %s8
  $region1: #{tpu_custom_call.1} parent=0
    #allocation2 [shape = 'u8[4096]{0}', space=vmem, size = 0x1000, scoped, tag = 'output window, operand 0, single buffered']
    #allocation3 [shape = 's32[1]{0}', space=sflag, size = 0x4, scoped, tag = 'scoped memory for tpu_custom_call.1']
    #allocation4 [shape = 'u8[4096]{0}', space=vmem, size = 0x1000, scoped, tag = 'output window, operand 1, single buffered']
    #allocation5 [shape = 's32[1]{0}', space=sflag, size = 0x4, scoped, tag = 'scoped memory for tpu_custom_call.1']
    #allocation6 [shape = 'u8[4096]{0}', space=vmem, size = 0x1000, scoped, tag = 'output window, operand 2, single buffered']
    %12 = vsyncpa [#allocation3], 0
    %13 = vsyncpa [#allocation5], 0
    // Predicated region
    $region2: #{tpu_custom_call.1} parent=1 // pred_check
      _
    $region3: #{tpu_custom_call.1} parent=1 // pred_check_branch
      %15 = sbr.rel (0) target = $region5
    $region4: #{tpu_custom_call.1} parent=1 // pred_region
      _
    $region5: #{tpu_custom_call.1} parent=1 // pred_fallthru
      _
    // Predicated region
    $region6: #{tpu_custom_call.1} parent=1 // pred_check
      _
    $region7: #{tpu_custom_call.1} parent=1 // pred_check_branch
      %17 = sbr.rel (0) target = $region9
    $region8: #{tpu_custom_call.1} parent=1 // pred_region
      _
    $region9: #{tpu_custom_call.1} parent=1 // pred_fallthru
      _
    // Predicated region
    $region10: #{tpu_custom_call.1} parent=1 // pred_check
      _
    $region11: #{tpu_custom_call.1} parent=1 // pred_check_branch
      %19 = sbr.rel (0) target = $region13
    $region12: #{tpu_custom_call.1} parent=1 // pred_region
      _
    $region13: #{tpu_custom_call.1} parent=1 // pred_fallthru
      _
    // Predicated region
    $region14: #{tpu_custom_call.1} parent=1 // pred_check
      _
    $region15: #{tpu_custom_call.1} parent=1 // pred_check_branch
      %21 = sbr.rel (0) target = $region17
    $region16: #{tpu_custom_call.1} parent=1 // pred_region
      _
    $region17: #{tpu_custom_call.1} parent=1 // pred_fallthru
      _
    %v22 = vld [vmem:[%s0] sm:$0xff]
    %v23 = vld [vmem:[%s1] sm:$0xff]
    %v24 = vld [vmem:[%s1 + $0x8] sm:$0xff]
    %v25 = vld [vmem:[%s1 + $0x10] sm:$0xff]
    %v26 = vld [vmem:[%s1 + $0x18] sm:$0xff]
    %vm27 = vcmask 261120
    %v29 = vsel %vm27, %v22, 0
    %31 = vmatpush.msra.mxu0 0.0
    %32 = vmatpush.msra.mxu0 0.0
    %33 = vmatpush.msra.mxu0 0.0
    %34 = vmatpush.msra.mxu0 0.0
    %35 = vmatpush.msra.mxu0 0.0
    %36 = vmatpush.msra.mxu0 0.0
    %37 = vmatpush.msra.mxu0 0.0
    %38 = vmatpush.msra.mxu0 0.0
    %39 = vmatpush.msra.mxu0 0.0
    %40 = vmatpush.msra.mxu0 0.0
    %41 = vmatpush.msra.mxu0 0.0
    %42 = vmatpush.msra.mxu0 0.0
    %43 = vmatpush.msra.mxu0 %v26
    %44 = vmatpush.msra.mxu0 %v25
    %45 = vmatpush.msra.mxu0 %v24
    %46 = vmatpush.msra.mxu0 %v23
    %47 = vmatmul.f32.gmra.mxu0 %v29
    %v48 = vpop.f32.mrf.mxu0
    %v49 = vadd.f32 0.0, %v48
    %50 = vdwg.mxu0
    %v51 = vmul.f32 %v49, 0.25
    %vm52 = vcmask 130048
    %53 = vst.msk [vmem:[#allocation2] sm:$0xff] %vm52, %v51
    %v54 = vld [vmem:[%s2] sm:$0xff]
    %v55 = vld [vmem:[%s2 + $0x8] sm:$0xff]
    %v56 = vld [vmem:[%s2 + $0x10] sm:$0xff]
    %v57 = vld [vmem:[%s2 + $0x18] sm:$0xff]
    %58 = vmatpush.msra.mxu0 0.0
    %59 = vmatpush.msra.mxu0 0.0
    %60 = vmatpush.msra.mxu0 0.0
    %61 = vmatpush.msra.mxu0 0.0
    %62 = vmatpush.msra.mxu0 0.0
    %63 = vmatpush.msra.mxu0 0.0
    %64 = vmatpush.msra.mxu0 0.0
    %65 = vmatpush.msra.mxu0 0.0
    %66 = vmatpush.msra.mxu0 0.0
    %67 = vmatpush.msra.mxu0 0.0
    %68 = vmatpush.msra.mxu0 0.0
    %69 = vmatpush.msra.mxu0 0.0
    %70 = vmatpush.msra.mxu0 %v57
    %71 = vmatpush.msra.mxu0 %v56
    %72 = vmatpush.msra.mxu0 %v55
    %73 = vmatpush.msra.mxu0 %v54
    %74 = vmatmul.f32.gmra.mxu0 %v29
    %v75 = vpop.f32.mrf.mxu0
    %v76 = vadd.f32 0.0, %v75
    %77 = vdwg.mxu0
    %78 = vst.msk [vmem:[#allocation4] sm:$0xff] %vm52, %v76
    %v79 = vld [vmem:[%s3] sm:$0xff]
    %v80 = vld [vmem:[%s3 + $0x8] sm:$0xff]
    %v81 = vld [vmem:[%s3 + $0x10] sm:$0xff]
    %v82 = vld [vmem:[%s3 + $0x18] sm:$0xff]
    %83 = vmatpush.msra.mxu0 0.0
    %84 = vmatpush.msra.mxu0 0.0
    %85 = vmatpush.msra.mxu0 0.0
    %86 = vmatpush.msra.mxu0 0.0
    %87 = vmatpush.msra.mxu0 0.0
    %88 = vmatpush.msra.mxu0 0.0
    %89 = vmatpush.msra.mxu0 0.0
    %90 = vmatpush.msra.mxu0 0.0
    %91 = vmatpush.msra.mxu0 0.0
    %92 = vmatpush.msra.mxu0 0.0
    %93 = vmatpush.msra.mxu0 0.0
    %94 = vmatpush.msra.mxu0 0.0
    %95 = vmatpush.msra.mxu0 %v82
    %96 = vmatpush.msra.mxu0 %v81
    %97 = vmatpush.msra.mxu0 %v80
    %98 = vmatpush.msra.mxu0 %v79
    %99 = vmatmul.f32.gmra.mxu0 %v29
    %v100 = vpop.f32.mrf.mxu0
    %v101 = vadd.f32 0.0, %v100
    %102 = vdwg.mxu0
    %103 = vst.msk [vmem:[#allocation6] sm:$0xff] %vm52, %v101
    // Predicated region
    $region18: #{tpu_custom_call.1} parent=1 // pred_check
      _
    $region19: #{tpu_custom_call.1} parent=1 // pred_check_branch
      %105 = sbr.rel (0) target = $region21
    $region20: #{tpu_custom_call.1} parent=1 // pred_region
      %107 = vsyncadd [#allocation3], 0
      %s109 = sshll.u32 [#allocation2], 4
      %s110 = int_to_ptr.vmem [resolvable:$true] %s109
      %s111 = sshll.u32 %s4, 4
      %s112 = int_to_ptr.hbm [resolvable:$true] %s111
      %114 = dma.vmem_to_hbm [thread:$0]  %s110, 128, %s112, [#allocation3]
    $region21: #{tpu_custom_call.1} parent=1 // pred_fallthru
      _
    // Predicated region
    $region22: #{tpu_custom_call.1} parent=1 // pred_check
      _
    $region23: #{tpu_custom_call.1} parent=1 // pred_check_branch
      %116 = sbr.rel (0) target = $region25
    $region24: #{tpu_custom_call.1} parent=1 // pred_region
      %118 = vsyncadd [#allocation5], 0
      %s120 = sshll.u32 [#allocation4], 4
      %s121 = int_to_ptr.vmem [resolvable:$true] %s120
      %s122 = sshll.u32 %s5, 4
      %s123 = int_to_ptr.hbm [resolvable:$true] %s122
      %125 = dma.vmem_to_hbm [thread:$0]  %s121, 128, %s123, [#allocation5]
    $region25: #{tpu_custom_call.1} parent=1 // pred_fallthru
      _
    // Predicated region
    $region26: #{tpu_custom_call.1} parent=1 // pred_check
      _
    $region27: #{tpu_custom_call.1} parent=1 // pred_check_branch
      %127 = sbr.rel (0) target = $region29
    $region28: #{tpu_custom_call.1} parent=1 // pred_region
      %129 = vsyncadd [#allocation5], 0
      %s131 = sshll.u32 [#allocation6], 4
      %s132 = int_to_ptr.vmem [resolvable:$true] %s131
      %s133 = sshll.u32 %s6, 4
      %s134 = int_to_ptr.hbm [resolvable:$true] %s133
      %136 = dma.vmem_to_hbm [thread:$0]  %s132, 128, %s134, [#allocation5]
    $region29: #{tpu_custom_call.1} parent=1 // pred_fallthru
      _
    // Predicated region
    $region30: #{tpu_custom_call.1} parent=1 // pred_check
      _
    $region31: #{tpu_custom_call.1} parent=1 // pred_check_branch
      %138 = sbr.rel (0) target = $region33
    $region32: #{tpu_custom_call.1} parent=1 // pred_region
      %140 = dma.done [#allocation3], 128
    $region33: #{tpu_custom_call.1} parent=1 // pred_fallthru
      _
    // Predicated region
    $region34: #{tpu_custom_call.1} parent=1 // pred_check
      _
    $region35: #{tpu_custom_call.1} parent=1 // pred_check_branch
      %142 = sbr.rel (0) target = $region37
    $region36: #{tpu_custom_call.1} parent=1 // pred_region
      %144 = dma.done [#allocation5], 128
    $region37: #{tpu_custom_call.1} parent=1 // pred_fallthru
      _
    // Predicated region
    $region38: #{tpu_custom_call.1} parent=1 // pred_check
      _
    $region39: #{tpu_custom_call.1} parent=1 // pred_check_branch
      %146 = sbr.rel (0) target = $region41
    $region40: #{tpu_custom_call.1} parent=1 // pred_region
      %148 = dma.done [#allocation5], 128
    $region41: #{tpu_custom_call.1} parent=1 // pred_fallthru
      _
    %149 = vsyncpa [#allocation3], 1
    %150 = vsyncpa [#allocation5], 1

</llo_original>
